<compile_context>
chip_gen: v7x
topology: tpu7x:2x2x1
jax: 0.10.0
libtpu: 0.0.40
codegen_flags: <defaults>
</compile_context>

<pallas_src>
import jax
import jax.numpy as jnp
from jax.experimental import pallas as pl
from jax.experimental.pallas import tpu as pltpu


# ---------------------------------------------------------------------------
# Tiling / VMEM planning
# ---------------------------------------------------------------------------
_TILE_ELEMS = 512 * 1024      # ~2 MiB f32 (1 MiB bf16) per x block (~85% of roofline)
_STRIPE_BUDGET = 36 << 20     # per-d-stripe VMEM cache; total stays < ~56 MiB (v7x 64 MiB/TC)
_MIN_RUN_BYTES = 512          # floor for strided-DMA row runs when shrinking tile_d


def _row_tile(n_rows, tile_d):
    tr = max(_TILE_ELEMS // tile_d, 8)
    if tr >= n_rows:
        return n_rows                 # full dim -> always a legal BlockSpec
    return max((tr // 8) * 8, 8)      # otherwise a multiple of 8 (sublanes)


def _round128_up(v):
    return max(128, ((v + 127) // 128) * 128)


def _plan(n_rows, d, itemsize):
    """Pick (tile_r, tile_d, fused).  tile_d is full-D or a 128-multiple."""
    tile_d = d
    if d % 128 == 0 and d > 128:
        # Prefer >= 2 feature stripes so both v7x TensorCores get a 'parallel'
        # d-slab, as long as each strided DMA row run stays >= 2 KiB.
        half = ((d // 2) // 128) * 128
        if half * itemsize >= 2048:
            tile_d = half
        # Very wide D: cap so row tiles keep >= 256 rows within the block budget.
        while (tile_d > 128 and 256 * tile_d > _TILE_ELEMS
               and (tile_d // 2) * itemsize >= 2048):
            tile_d = _round128_up(tile_d // 2)

    def stripe_bytes(td):
        tr = _row_tile(n_rows, td)
        return pl.cdiv(n_rows, tr) * tr * td * itemsize

    # Shrink the feature tile (lane-dense 128-multiples) until the per-stripe
    # VMEM cache fits; otherwise stream twice (two-pass fallback).
    while (stripe_bytes(tile_d) > _STRIPE_BUDGET and d % 128 == 0 and tile_d > 128
           and (tile_d // 2) * itemsize >= _MIN_RUN_BYTES):
        tile_d = _round128_up(tile_d // 2)

    fused = stripe_bytes(tile_d) <= _STRIPE_BUDGET
    return _row_tile(n_rows, tile_d), tile_d, fused


# ---------------------------------------------------------------------------
# Fused single-HBM-read path
# ---------------------------------------------------------------------------
def _make_fused_kernel(n_rows, num_r, tile_r, eps):
    needs_mask = (n_rows % tile_r) != 0
    inv_n = 1.0 / n_rows
    # N == 1 -> NaN, matching torch.std(correction=1).
    inv_nm1 = (1.0 / (n_rows - 1)) if n_rows > 1 else float("nan")

    def kernel(x_ref, ab_ref, o_ref, stripe_ref, stat_ref):
        p = pl.program_id(1)   # 0 = stats + cache, 1 = normalize from the cache
        r = pl.program_id(2)

        @pl.when(p == 0)
        def _stats_phase():
            @pl.when(r == 0)
            def _init():
                stat_ref[...] = jnp.zeros_like(stat_ref)

            xb = x_ref[...]
            stripe_ref[r] = xb                       # cache in input dtype for phase 1
            x32 = xb.astype(jnp.float32)

            def accumulate(v):
                stat_ref[0:1, :] += jnp.sum(v, axis=0, keepdims=True)
                stat_ref[1:2, :] += jnp.sum(v * v, axis=0, keepdims=True)

            if needs_mask:
                # Only the tail row tile pays for the iota/compare/select.
                @pl.when(r < num_r - 1)
                def _full():
                    accumulate(x32)

                @pl.when(r == num_r - 1)
                def _tail():
                    row = jax.lax.broadcasted_iota(jnp.int32, x32.shape, 0) + r * tile_r
                    accumulate(jnp.where(row < n_rows, x32, 0.0))
            else:
                accumulate(x32)

            @pl.when(r == num_r - 1)
            def _epilogue():
                # Fold mean/std/alpha/bias/eps into per-feature scale/shift so the
                # normalize phase is a pure FMA (one sqrt + div per d-stripe).
                s = stat_ref[0:1, :]
                ss = stat_ref[1:2, :]
                mean = s * inv_n
                var = jnp.maximum((ss - s * mean) * inv_nm1, 0.0)
                std = jnp.sqrt(var)
                scale = ab_ref[0:1, :] / (std + eps)
                shift = ab_ref[1:2, :] - mean * scale
                stat_ref[0:1, :] = scale
                stat_ref[1:2, :] = shift

        @pl.when(p == 1)
        def _normalize_phase():
            x32 = stripe_ref[r].astype(jnp.float32)
            o_ref[...] = (x32 * stat_ref[0:1, :] + stat_ref[1:2, :]).astype(o_ref.dtype)

    return kernel


def _fused_call(x2d, ab, eps, tile_r, tile_d):
    N, D = x2d.shape
    itemsize = jnp.dtype(x2d.dtype).itemsize
    num_r = pl.cdiv(N, tile_r)
    num_d = pl.cdiv(D, tile_d)

    tile_bytes = tile_r * tile_d * itemsize
    stripe_b = num_r * tile_r * tile_d * itemsize
    # stripe + in/out double buffers + f32 tile temporaries + slack (v7x-safe).
    vmem_limit = stripe_b + 4 * tile_bytes + 4 * tile_r * tile_d * 4 + (2 << 20)
    vmem_limit = int(min(max(vmem_limit, 32 << 20), 60 << 20))

    kernel = _make_fused_kernel(N, num_r, tile_r, eps)

    return pl.pallas_call(
        kernel,
        out_shape=jax.ShapeDtypeStruct((N, D), x2d.dtype),
        grid=(num_d, 2, num_r),
        in_specs=[
            # Phase 0 streams the row tiles; phase 1 pins the index on the last
            # tile so the pipeline elides further HBM reads (data is replayed
            # from the VMEM stripe scratch instead).
            pl.BlockSpec((tile_r, tile_d),
                         lambda d, p, r: ((1 - p) * r + p * (num_r - 1), d)),
            # alpha/bias packed as (2, D): one tiny resident block per d-stripe.
            pl.BlockSpec((2, tile_d), lambda d, p, r: (0, d)),
        ],
        # Untouched during phase 0 (index pinned at block 0, so nothing is flushed
        # before phase 1 has stored real data); streams out during phase 1.
        out_specs=pl.BlockSpec((tile_r, tile_d), lambda d, p, r: (p * r, d)),
        scratch_shapes=[
            pltpu.VMEM((num_r, tile_r, tile_d), x2d.dtype),  # column-stripe cache
            pltpu.VMEM((2, tile_d), jnp.float32),            # sum/sumsq -> scale/shift
        ],
        compiler_params=pltpu.CompilerParams(
            dimension_semantics=("parallel", "arbitrary", "arbitrary"),
            vmem_limit_bytes=vmem_limit,
        ),
    )(x2d, ab)


# ---------------------------------------------------------------------------
# Two-pass fallback (stripe does not fit VMEM): stream x twice
# ---------------------------------------------------------------------------
def _make_stats_kernel(n_rows, num_r, tile_r):
    needs_mask = (n_rows % tile_r) != 0

    def kernel(x_ref, stat_ref):
        r = pl.program_id(1)

        @pl.when(r == 0)
        def _init():
            stat_ref[...] = jnp.zeros_like(stat_ref)

        x32 = x_ref[...].astype(jnp.float32)

        def accumulate(v):
            stat_ref[0:1, :] += jnp.sum(v, axis=0, keepdims=True)
            stat_ref[1:2, :] += jnp.sum(v * v, axis=0, keepdims=True)

        if needs_mask:
            @pl.when(r < num_r - 1)
            def _full():
                accumulate(x32)

            @pl.when(r == num_r - 1)
            def _tail():
                row = jax.lax.broadcasted_iota(jnp.int32, x32.shape, 0) + r * tile_r
                accumulate(jnp.where(row < n_rows, x32, 0.0))
        else:
            accumulate(x32)

    return kernel


def _normalize_kernel(x_ref, ss_ref, o_ref):
    x32 = x_ref[...].astype(jnp.float32)
    o_ref[...] = (x32 * ss_ref[0:1, :] + ss_ref[1:2, :]).astype(o_ref.dtype)


def _two_pass_call(x2d, ab, eps, tile_r, tile_d):
    N, D = x2d.shape
    num_r = pl.cdiv(N, tile_r)
    num_d = pl.cdiv(D, tile_d)
    vmem_limit = 32 << 20   # explicit (v5e scoped default is only 16 MiB)

    stats = pl.pallas_call(
        _make_stats_kernel(N, num_r, tile_r),
        out_shape=jax.ShapeDtypeStruct((2, D), jnp.float32),
        grid=(num_d, num_r),
        in_specs=[pl.BlockSpec((tile_r, tile_d), lambda d, r: (r, d))],
        out_specs=pl.BlockSpec((2, tile_d), lambda d, r: (0, d)),  # resident over r
        compiler_params=pltpu.CompilerParams(
            dimension_semantics=("parallel", "arbitrary"),
            vmem_limit_bytes=vmem_limit,
        ),
    )(x2d)

    # O(D) epilogue: fold everything into scale/shift (hot pass 2 is a pure FMA).
    s, ss = stats[0:1], stats[1:2]
    mean = s * jnp.float32(1.0 / N)
    inv_nm1 = jnp.float32(1.0 / (N - 1)) if N > 1 else jnp.float32(jnp.nan)
    var = jnp.maximum((ss - s * mean) * inv_nm1, 0.0)
    std = jnp.sqrt(var)
    scale = ab[0:1] / (std + jnp.float32(eps))
    shift = ab[1:2] - mean * scale
    scale_shift = jnp.concatenate([scale, shift], axis=0)  # (2, D) f32

    return pl.pallas_call(
        _normalize_kernel,
        out_shape=jax.ShapeDtypeStruct((N, D), x2d.dtype),
        grid=(num_d, num_r),
        in_specs=[
            pl.BlockSpec((tile_r, tile_d), lambda d, r: (r, d)),
            pl.BlockSpec((2, tile_d), lambda d, r: (0, d)),
        ],
        out_specs=pl.BlockSpec((tile_r, tile_d), lambda d, r: (r, d)),
        compiler_params=pltpu.CompilerParams(
            dimension_semantics=("parallel", "parallel"),
            vmem_limit_bytes=vmem_limit,
        ),
    )(x2d, scale_shift)


# ---------------------------------------------------------------------------
# Public wrapper
# ---------------------------------------------------------------------------
def norm_forward(x, alpha, bias, eps=1e-6, force_two_pass=False):
    """x: (B, S, D); alpha, bias: (D,).  alpha*(x-mean)/(std+eps)+bias over dims (0,1)."""
    B, S, D = x.shape
    N = B * S
    x2d = x.reshape(N, D)
    ab = jnp.stack([alpha.reshape(D), bias.reshape(D)]).astype(jnp.float32)  # (2, D)
    itemsize = jnp.dtype(x2d.dtype).itemsize

    tile_r, tile_d, fused = _plan(N, D, itemsize)
    if fused and not force_two_pass:
        out2d = _fused_call(x2d, ab, eps, tile_r, tile_d)
    else:
        out2d = _two_pass_call(x2d, ab, eps, tile_r, tile_d)
    return out2d.reshape(B, S, D)


if __name__ == "__main__":
    # Small shapes consistent with the module: batch=2, seq=8, d_model=32.
    B, S, D = 2, 8, 32
    key = jax.random.PRNGKey(0)
    k_x, k_a, k_b = jax.random.split(key, 3)
    x = jax.random.normal(k_x, (B, S, D), dtype=jnp.float32)
    eps = 1e-6

    def reference(x, alpha, bias):
        mean = jnp.mean(x, axis=(0, 1), keepdims=True)
        std = jnp.std(x, axis=(0, 1), keepdims=True, ddof=1)
        return alpha * (x - mean) / (std + eps) + bias

    # 1) default params (torch.ones / torch.zeros) through the fused single-read path.
    alpha = jnp.ones((D,), dtype=jnp.float32)
    bias = jnp.zeros((D,), dtype=jnp.float32)
    out = norm_forward(x, alpha, bias, eps=eps)
    jax.block_until_ready(out)
    assert jnp.allclose(out, reference(x, alpha, bias), atol=1e-5, rtol=1e-5), \
        "mismatch vs reference (ones/zeros params, fused path)"

    # 2) non-trivial alpha/bias to exercise the in-kernel folded scale/shift.
    alpha2 = jax.random.normal(k_a, (D,), dtype=jnp.float32)
    bias2 = jax.random.normal(k_b, (D,), dtype=jnp.float32)
    out2 = norm_forward(x, alpha2, bias2, eps=eps)
    jax.block_until_ready(out2)
    assert jnp.allclose(out2, reference(x, alpha2, bias2), atol=1e-5, rtol=1e-5), \
        "mismatch vs reference (random params, fused path)"

    # 3) exercise the two-pass fallback (used when the VMEM stripe would not fit).
    out3 = norm_forward(x, alpha2, bias2, eps=eps, force_two_pass=True)
    jax.block_until_ready(out3)
    assert jnp.allclose(out3, reference(x, alpha2, bias2), atol=1e-5, rtol=1e-5), \
        "mismatch vs reference (random params, two-pass fallback)"

    print("KERNEL_OK")
</pallas_src>

<mosaic_0001>
module attributes {stable_mosaic.version = 11 : i64} {
  func.func @kernel(%arg0: i32, %arg1: i32, %arg2: i32, %arg3: memref<16x32xf32, #tpu.memory_space<vmem>>, %arg4: memref<2x32xf32, #tpu.memory_space<vmem>>, %arg5: memref<16x32xf32, #tpu.memory_space<vmem>>, %arg6: memref<1x16x32xf32, #tpu.memory_space<vmem>>, %arg7: memref<2x32xf32, #tpu.memory_space<vmem>>) attributes {dimension_semantics = [#tpu.dimension_semantics<parallel>, #tpu.dimension_semantics<arbitrary>, #tpu.dimension_semantics<arbitrary>], iteration_bounds = array<i64: 1, 2, 1>, scalar_prefetch = 0 : i64, scratch_operands = 2 : i64, tpu.core_type = #tpu.core_type<tc>, window_params = [{transform_indices = @transform_0, window_bounds = array<i64: 16, 32>}, {transform_indices = @transform_1, window_bounds = array<i64: 2, 32>}, {transform_indices = @transform_2, window_bounds = array<i64: 16, 32>}]} {
    %c0_i32 = arith.constant 0 : i32
    %0 = arith.cmpi eq, %arg1, %c0_i32 : i32
    %1 = arith.extui %0 : i1 to i32
    %c0_i32_0 = arith.constant 0 : i32
    %2 = arith.cmpi ne, %1, %c0_i32_0 : i32
    scf.if %2 {
      %c0_i32_2 = arith.constant 0 : i32
      %6 = arith.cmpi eq, %arg2, %c0_i32_2 : i32
      %7 = arith.extui %6 : i1 to i32
      %c0_i32_3 = arith.constant 0 : i32
      %8 = arith.cmpi ne, %7, %c0_i32_3 : i32
      scf.if %8 {
        %cst_17 = arith.constant 0.000000e+00 : f32
        %28 = vector.broadcast %cst_17 : f32 to vector<2x32xf32>
        %c0_18 = arith.constant 0 : index
        %c0_19 = arith.constant 0 : index
        %29 = vector.load %arg7[%c0_18, %c0_19] : memref<2x32xf32, #tpu.memory_space<vmem>>, vector<2x32xf32>
        tpu.vector_store %arg7[%c0_18, %c0_19], %28 {strides = array<i32>} : memref<2x32xf32, #tpu.memory_space<vmem>>, vector<2x32xf32>,
      } else {
      }
      %c0 = arith.constant 0 : index
      %c0_4 = arith.constant 0 : index
      %9 = vector.load %arg3[%c0, %c0_4] : memref<16x32xf32, #tpu.memory_space<vmem>>, vector<16x32xf32>
      %10 = arith.index_cast %arg2 : i32 to index
      %c0_5 = arith.constant 0 : index
      %c0_6 = arith.constant 0 : index
      %11 = vector.load %arg6[%10, %c0_5, %c0_6] : memref<1x16x32xf32, #tpu.memory_space<vmem>>, vector<1x16x32xf32>
      %12 = vector.shape_cast %11 : vector<1x16x32xf32> to vector<16x32xf32>
      %13 = vector.shape_cast %9 : vector<16x32xf32> to vector<1x16x32xf32>
      tpu.vector_store %arg6[%10, %c0_5, %c0_6], %13 {strides = array<i32>} : memref<1x16x32xf32, #tpu.memory_space<vmem>>, vector<1x16x32xf32>,
      %c0_7 = arith.constant 0 : index
      %c0_8 = arith.constant 0 : index
      %14 = vector.load %arg7[%c0_7, %c0_8] : memref<2x32xf32, #tpu.memory_space<vmem>>, vector<1x32xf32>
      %cst = arith.constant dense<0.000000e+00> : vector<32xf32>
      %15 = vector.multi_reduction <add>, %9, %cst [0] : vector<16x32xf32> to vector<32xf32>
      %16 = vector.shape_cast %15 : vector<32xf32> to vector<1x32xf32>
      %17 = arith.addf %14, %16 : vector<1x32xf32>
      %c0_9 = arith.constant 0 : index
      %c0_10 = arith.constant 0 : index
      %18 = vector.load %arg7[%c0_9, %c0_10] : memref<2x32xf32, #tpu.memory_space<vmem>>, vector<1x32xf32>
      tpu.vector_store %arg7[%c0_9, %c0_10], %17 {strides = array<i32>} : memref<2x32xf32, #tpu.memory_space<vmem>>, vector<1x32xf32>,
      %c1 = arith.constant 1 : index
      %c0_11 = arith.constant 0 : index
      %19 = vector.load %arg7[%c1, %c0_11] : memref<2x32xf32, #tpu.memory_space<vmem>>, vector<1x32xf32>
      %20 = arith.mulf %9, %9 : vector<16x32xf32>
      %cst_12 = arith.constant dense<0.000000e+00> : vector<32xf32>
      %21 = vector.multi_reduction <add>, %20, %cst_12 [0] : vector<16x32xf32> to vector<32xf32>
      %22 = vector.shape_cast %21 : vector<32xf32> to vector<1x32xf32>
      %23 = arith.addf %19, %22 : vector<1x32xf32>
      %c1_13 = arith.constant 1 : index
      %c0_14 = arith.constant 0 : index
      %24 = vector.load %arg7[%c1_13, %c0_14] : memref<2x32xf32, #tpu.memory_space<vmem>>, vector<1x32xf32>
      tpu.vector_store %arg7[%c1_13, %c0_14], %23 {strides = array<i32>} : memref<2x32xf32, #tpu.memory_space<vmem>>, vector<1x32xf32>,
      %c0_i32_15 = arith.constant 0 : i32
      %25 = arith.cmpi eq, %arg2, %c0_i32_15 : i32
      %26 = arith.extui %25 : i1 to i32
      %c0_i32_16 = arith.constant 0 : i32
      %27 = arith.cmpi ne, %26, %c0_i32_16 : i32
      scf.if %27 {
        %c0_17 = arith.constant 0 : index
        %c0_18 = arith.constant 0 : index
        %28 = vector.load %arg7[%c0_17, %c0_18] : memref<2x32xf32, #tpu.memory_space<vmem>>, vector<1x32xf32>
        %c1_19 = arith.constant 1 : index
        %c0_20 = arith.constant 0 : index
        %29 = vector.load %arg7[%c1_19, %c0_20] : memref<2x32xf32, #tpu.memory_space<vmem>>, vector<1x32xf32>
        %cst_21 = arith.constant 6.250000e-02 : f32
        %30 = vector.broadcast %cst_21 : f32 to vector<1x32xf32>
        %31 = arith.mulf %28, %30 : vector<1x32xf32>
        %32 = arith.mulf %28, %31 : vector<1x32xf32>
        %33 = arith.subf %29, %32 : vector<1x32xf32>
        %cst_22 = arith.constant 0.0666666701 : f32
        %34 = vector.broadcast %cst_22 : f32 to vector<1x32xf32>
        %35 = arith.mulf %33, %34 : vector<1x32xf32>
        %cst_23 = arith.constant 0.000000e+00 : f32
        %36 = vector.broadcast %cst_23 : f32 to vector<1x32xf32>
        %37 = arith.maximumf %35, %36 : vector<1x32xf32>
        %38 = math.sqrt %37 : vector<1x32xf32>
        %c0_24 = arith.constant 0 : index
        %c0_25 = arith.constant 0 : index
        %39 = vector.load %arg4[%c0_24, %c0_25] : memref<2x32xf32, #tpu.memory_space<vmem>>, vector<1x32xf32>
        %cst_26 = arith.constant 9.99999997E-7 : f32
        %40 = vector.broadcast %cst_26 : f32 to vector<1x32xf32>
        %41 = arith.addf %38, %40 : vector<1x32xf32>
        %42 = arith.divf %39, %41 : vector<1x32xf32>
        %c1_27 = arith.constant 1 : index
        %c0_28 = arith.constant 0 : index
        %43 = vector.load %arg4[%c1_27, %c0_28] : memref<2x32xf32, #tpu.memory_space<vmem>>, vector<1x32xf32>
        %44 = arith.mulf %31, %42 : vector<1x32xf32>
        %45 = arith.subf %43, %44 : vector<1x32xf32>
        %c0_29 = arith.constant 0 : index
        %c0_30 = arith.constant 0 : index
        %46 = vector.load %arg7[%c0_29, %c0_30] : memref<2x32xf32, #tpu.memory_space<vmem>>, vector<1x32xf32>
        tpu.vector_store %arg7[%c0_29, %c0_30], %42 {strides = array<i32>} : memref<2x32xf32, #tpu.memory_space<vmem>>, vector<1x32xf32>,
        %c1_31 = arith.constant 1 : index
        %c0_32 = arith.constant 0 : index
        %47 = vector.load %arg7[%c1_31, %c0_32] : memref<2x32xf32, #tpu.memory_space<vmem>>, vector<1x32xf32>
        tpu.vector_store %arg7[%c1_31, %c0_32], %45 {strides = array<i32>} : memref<2x32xf32, #tpu.memory_space<vmem>>, vector<1x32xf32>,
      } else {
      }
    } else {
    }
    %c1_i32 = arith.constant 1 : i32
    %3 = arith.cmpi eq, %arg1, %c1_i32 : i32
    %4 = arith.extui %3 : i1 to i32
    %c0_i32_1 = arith.constant 0 : i32
    %5 = arith.cmpi ne, %4, %c0_i32_1 : i32
    scf.if %5 {
      %6 = arith.index_cast %arg2 : i32 to index
      %c0 = arith.constant 0 : index
      %c0_2 = arith.constant 0 : index
      %7 = vector.load %arg6[%6, %c0, %c0_2] : memref<1x16x32xf32, #tpu.memory_space<vmem>>, vector<1x16x32xf32>
      %8 = vector.shape_cast %7 : vector<1x16x32xf32> to vector<16x32xf32>
      %c0_3 = arith.constant 0 : index
      %c0_4 = arith.constant 0 : index
      %9 = vector.load %arg7[%c0_3, %c0_4] : memref<2x32xf32, #tpu.memory_space<vmem>>, vector<1x32xf32>
      %10 = vector.broadcast %9 : vector<1x32xf32> to vector<16x32xf32>
      %11 = arith.mulf %8, %10 : vector<16x32xf32>
      %c1 = arith.constant 1 : index
      %c0_5 = arith.constant 0 : index
      %12 = vector.load %arg7[%c1, %c0_5] : memref<2x32xf32, #tpu.memory_space<vmem>>, vector<1x32xf32>
      %13 = vector.broadcast %12 : vector<1x32xf32> to vector<16x32xf32>
      %14 = arith.addf %11, %13 : vector<16x32xf32>
      %c0_6 = arith.constant 0 : index
      %c0_7 = arith.constant 0 : index
      %15 = vector.load %arg5[%c0_6, %c0_7] : memref<16x32xf32, #tpu.memory_space<vmem>>, vector<16x32xf32>
      tpu.vector_store %arg5[%c0_6, %c0_7], %14 {strides = array<i32>} : memref<16x32xf32, #tpu.memory_space<vmem>>, vector<16x32xf32>,
    } else {
    }
    return
  }
  func.func @transform_0(%arg0: i32, %arg1: i32, %arg2: i32) -> (i32, i32) {
    %c1_i32 = arith.constant 1 : i32
    %0 = arith.subi %c1_i32, %arg1 : i32
    %1 = arith.muli %0, %arg2 : i32
    %c0_i32 = arith.constant 0 : i32
    %2 = arith.muli %arg1, %c0_i32 : i32
    %3 = arith.addi %1, %2 : i32
    %c0_i32_0 = arith.constant 0 : i32
    return %3, %arg0 : i32, i32
  }
  func.func @transform_1(%arg0: i32, %arg1: i32, %arg2: i32) -> (i32, i32) {
    %c0_i32 = arith.constant 0 : i32
    %c0_i32_0 = arith.constant 0 : i32
    return %c0_i32, %arg0 : i32, i32
  }
  func.func @transform_2(%arg0: i32, %arg1: i32, %arg2: i32) -> (i32, i32) {
    %0 = arith.muli %arg1, %arg2 : i32
    %c0_i32 = arith.constant 0 : i32
    return %0, %arg0 : i32, i32
  }
}

</mosaic_0001>

<llo_original>
// kernel: tpu_custom_call.1
$region0: #{tpu_custom_call.1}
  #allocation0 [shape = 'u32[]', space=smem, size = 0x4, offset = 0x4, fixed_abs, tag = 'smem constant byte address 0x4 - core index']
  #allocation1 [shape = 'u32[144,128]{1,0:T(1,128)}', space=vmem, size = 0x12000, scoped, tag = 'internal scratch']
  #allocation2 [shape = 'f32[1,16,32]{2,1,0:T(8,128)}', space=vmem, size = 0x2000, scoped, tag = 'scratch operand']
  #allocation3 [shape = 'f32[2,32]{1,0:T(2,128)}', space=vmem, size = 0x400, scoped, tag = 'scratch operand']
  %s0 = inlined_call_operand.hbm [shape: f32[16,32], index: 0, kind: input, shape index: {}]
  %s1 = inlined_call_operand.vmem [shape: f32[2,32], index: 1, kind: input, shape index: {}]
  %s2 = inlined_call_operand.hbm [shape: f32[16,32], index: 2, kind: output, shape index: {}]
  %s3 = sld [smem:[#allocation0]]
  $region61: #{tpu_custom_call.1} parent=0
    _
  %s5 = ssub.s32 1, %s3
  %s6 = scalar_select 0, %s5, %s3
  $region1: #{tpu_custom_call.1} parent=0
    #allocation4 [shape = 'u8[16384]{0}', space=vmem, size = 0x4000, scoped, tag = 'input window, operand 0']
    #allocation5 [shape = 's32[2]{0}', space=sflag, size = 0x8, scoped, tag = 'scoped memory for tpu_custom_call.1']
    #allocation6 [shape = 's32[2]{0}', space=sflag, size = 0x8, scoped, tag = 'scoped memory for tpu_custom_call.1']
    #allocation7 [shape = 'u8[16384]{0}', space=vmem, size = 0x4000, scoped, tag = 'output window, operand 0']
    %7 = vsyncpa [#allocation5], 0
    %s8 = scalar_lea.sflag [#allocation5], 1
    %9 = vsyncpa %s8, 0
    %10 = vsyncpa [#allocation6], 0
    %s11 = scalar_lea.sflag [#allocation6], 1
    %12 = vsyncpa %s11, 0
    loop: start=0, step=1, limit=4
    $region2: #{tpu_custom_call.1} parent=1 // loop_pre_header
      _
    $region3: #{tpu_custom_call.1} parent=1 // loop_header
      %s14 = sphi 0, %s18
      %p15 = scmp.ge.s32.totalorder %s14, 4
      %s21 = sphi 0, %s40
      %s22 = sphi 0, %s36
      %s23 = sphi 0, %s32
      %s24 = sphi 0, %s21
      %s25 = sphi 0, %s22
      %s26 = sphi 0, %s23
      %s27 = sphi 0, %s24
      %s28 = sphi 0, %s25
      %s29 = sphi 0, %s26
      %s49 = sphi 0, %s51
      %s52 = sphi 0, %s49
      %s53 = sphi 0, %s52
      %s69 = sphi 0, %s53
      %s75 = sphi 0, %s77
      %s78 = sphi 0, %s75
      %s79 = sphi 0, %s78
      %s95 = sphi 0, %s79
      %s105 = sphi 0, %s107
      %s108 = sphi 0, %s105
      %s109 = sphi 0, %s108
      %s125 = sphi 0, %s109
    $region4: #{tpu_custom_call.1} parent=1 // loop_header_branch
      %17 = sbr.rel (%p15) target = $region8
    $region5: #{tpu_custom_call.1} parent=1 // loop_body
      %s19 = ssub.s32 %s14, 1
      %s20 = ssub.s32 %s14, 2
      %s30 = sadd.s32 1, %s23
      %p31 = scmp.ge.s32.totalorder %s30, 1
      %s32 = scalar_select %p31, 0, %s30
      %s33 = sadd.s32 1, %s22
      %s34 = scalar_select %p31, %s33, %s22
      %p35 = scmp.ge.s32.totalorder %s34, 2
      %s36 = scalar_select %p35, 0, %s34
      %s37 = sadd.s32 1, %s21
      %s38 = scalar_select %p35, %s37, %s21
      %p39 = scmp.ge.s32.totalorder %s38, 1
      %s40 = scalar_select %p39, 0, %s38
      %s41 = ssub.s32 1, %s22
      %s42 = smul.u32 %s41, %s23
      %s43 = ssub.s32 1, %s36
      %s44 = smul.u32 %s43, %s32
      %s45 = ssub.s32 %s42, %s44
      %s46 = ssub.s32 %s21, %s40
      %s47 = sor.u32 %s45, %s46
      %p48 = scmp.eq.s32.totalorder %s47, 0
      %s50 = sadd.s32 %s49, 1
      %s51 = scalar_select %p48, %s49, %s50
      %p54 = pneg %p48
      %p55 = scmp.eq.s32.totalorder %s14, 1
      %p56 = por %p54, %p55
      %p57 = scmp.ne.s32.totalorder %s49, %s52
      %p58 = scmp.eq.s32.totalorder %s14, 0
      %p59 = por %p57, %p58
      %p60 = scmp.ne.s32.totalorder %s49, %s52
      %p61 = scmp.eq.s32.totalorder %s19, 1
      %p62 = por %p60, %p61
      %p63 = scmp.ne.s32.totalorder %s52, %s53
      %p64 = scmp.eq.s32.totalorder %s19, 0
      %p65 = por %p63, %p64
      %p66 = scmp.ne.s32.totalorder %s52, %s53
      %p67 = scmp.eq.s32.totalorder %s20, 1
      %p68 = por %p66, %p67
      %p70 = scmp.ne.s32.totalorder %s53, %s69
      %p71 = scmp.eq.s32.totalorder %s20, 0
      %p72 = por %p70, %p71
      %s73 = ssub.s32 %s21, %s40
      %p74 = scmp.eq.s32.totalorder %s73, 0
      %s76 = sadd.s32 %s75, 1
      %s77 = scalar_select %p74, %s75, %s76
      %p80 = pneg %p74
      %p81 = scmp.eq.s32.totalorder %s14, 1
      %p82 = por %p80, %p81
      %p83 = scmp.ne.s32.totalorder %s75, %s78
      %p84 = scmp.eq.s32.totalorder %s14, 0
      %p85 = por %p83, %p84
      %p86 = scmp.ne.s32.totalorder %s75, %s78
      %p87 = scmp.eq.s32.totalorder %s19, 1
      %p88 = por %p86, %p87
      %p89 = scmp.ne.s32.totalorder %s78, %s79
      %p90 = scmp.eq.s32.totalorder %s19, 0
      %p91 = por %p89, %p90
      %p92 = scmp.ne.s32.totalorder %s78, %s79
      %p93 = scmp.eq.s32.totalorder %s20, 1
      %p94 = por %p92, %p93
      %p96 = scmp.ne.s32.totalorder %s79, %s95
      %p97 = scmp.eq.s32.totalorder %s20, 0
      %p98 = por %p96, %p97
      %s99 = smul.u32 %s22, %s23
      %s100 = smul.u32 %s36, %s32
      %s101 = ssub.s32 %s99, %s100
      %s102 = ssub.s32 %s21, %s40
      %s103 = sor.u32 %s101, %s102
      %p104 = scmp.eq.s32.totalorder %s103, 0
      %s106 = sadd.s32 %s105, 1
      %s107 = scalar_select %p104, %s105, %s106
      %p110 = pneg %p104
      %p111 = scmp.eq.s32.totalorder %s14, 1
      %p112 = por %p110, %p111
      %p113 = scmp.ne.s32.totalorder %s105, %s108
      %p114 = scmp.eq.s32.totalorder %s14, 0
      %p115 = por %p113, %p114
      %p116 = scmp.ne.s32.totalorder %s105, %s108
      %p117 = scmp.eq.s32.totalorder %s19, 1
      %p118 = por %p116, %p117
      %p119 = scmp.ne.s32.totalorder %s108, %s109
      %p120 = scmp.eq.s32.totalorder %s19, 0
      %p121 = por %p119, %p120
      %p122 = scmp.ne.s32.totalorder %s108, %s109
      %p123 = scmp.eq.s32.totalorder %s20, 1
      %p124 = por %p122, %p123
      %p126 = scmp.ne.s32.totalorder %s109, %s125
      %p127 = scmp.eq.s32.totalorder %s20, 0
      %p128 = por %p126, %p127
      %p129 = scmp.le.s32.totalorder 1, %s14
      %p130 = scmp.lt.s32.totalorder %s14, 3
      %p131 = pnand %p129, %p130
      %p132 = pneg %p131
      // Predicated region
      $region9: #{tpu_custom_call.1} parent=5 // pred_check
        _
      $region10: #{tpu_custom_call.1} parent=5 // pred_check_branch
        %134 = sbr.rel (%p131) target = $region12
      $region11: #{tpu_custom_call.1} parent=5 // pred_region
        %s135 = ssub.s32 %s14, 1
        // Predicated region
        $region13: #{tpu_custom_call.1} parent=11 // pred_check
          %p136 = pneg %p91
        $region14: #{tpu_custom_call.1} parent=11 // pred_check_branch
          %138 = sbr.rel (%p136) target = $region16
        $region15: #{tpu_custom_call.1} parent=11 // pred_region
          %p139 = scmp.lt.s32.totalorder %s24, 0
          %s140 = scalar_select %p139, %s24, 0
          %s141 = smul.addr %s140, 2
          %s142 = scalar_lea.vmem %s1, %s141
        $region16: #{tpu_custom_call.1} parent=11 // pred_fallthru
          _
      $region12: #{tpu_custom_call.1} parent=5 // pred_fallthru
        _
      %p143 = scmp.lt.s32.totalorder %s14, 2
      // Predicated region
      $region17: #{tpu_custom_call.1} parent=5 // pred_check
        %p144 = pneg %p143
      $region18: #{tpu_custom_call.1} parent=5 // pred_check_branch
        %146 = sbr.rel (%p144) target = $region20
      $region19: #{tpu_custom_call.1} parent=5 // pred_region
        // Predicated region
        $region21: #{tpu_custom_call.1} parent=19 // pred_check
          %p147 = pneg %p59
        $region22: #{tpu_custom_call.1} parent=19 // pred_check_branch
          %149 = sbr.rel (%p147) target = $region24
        $region23: #{tpu_custom_call.1} parent=19 // pred_region
          %s150 = sand.u32 %s49, 1
          %s151 = scalar_lea.sflag [#allocation5], %s150
          %s152 = sand.u32 %s49, 1
          %s153 = smul.addr %s152, 16
          %s154 = scalar_lea.vmem [#allocation4], %s153
          %s155 = ssub.s32 1, %s22
          %s156 = smul.u32 %s155, %s23
          %s157 = smul.u32 2, %s156
          %s159 = ssub.s32 256, 256
          %160 = vsyncadd %s151, %s159
          %s161 = sadd.s32 %s21, %s157
          %s162 = smul.addr %s161, 128
          %s163 = scalar_lea.hbm %s0, %s162
          %s164 = sshll.u32 %s154, 4
          %s165 = int_to_ptr.vmem [resolvable:$true] %s164
          %170 = dma.hbm_to_vmem [thread:$0]  %s163, 256, %s165, %s151, 128, 128, 8
        $region24: #{tpu_custom_call.1} parent=19 // pred_fallthru
          _
      $region20: #{tpu_custom_call.1} parent=5 // pred_fallthru
        _
      %p171 = scmp.le.s32.totalorder 1, %s14
      %p172 = scmp.lt.s32.totalorder %s14, 3
      %p173 = pnand %p171, %p172
      %p174 = pneg %p173
      // Predicated region
      $region25: #{tpu_custom_call.1} parent=5 // pred_check
        _
      $region26: #{tpu_custom_call.1} parent=5 // pred_check_branch
        %176 = sbr.rel (%p173) target = $region28
      $region27: #{tpu_custom_call.1} parent=5 // pred_region
        %s177 = ssub.s32 %s14, 1
        %s178 = sand.u32 %s52, 1
        %s179 = scalar_lea.sflag [#allocation5], %s178
        %s180 = sand.u32 %s52, 1
        %s181 = smul.addr %s180, 16
        %s182 = scalar_lea.vmem [#allocation4], %s181
        // Predicated region
        $region29: #{tpu_custom_call.1} parent=27 // pred_check
          %p183 = pneg %p65
        $region30: #{tpu_custom_call.1} parent=27 // pred_check_branch
          %185 = sbr.rel (%p183) target = $region32
        $region31: #{tpu_custom_call.1} parent=27 // pred_region
          %186 = dma.done %s179, 256
        $region32: #{tpu_custom_call.1} parent=27 // pred_fallthru
          _
        %s187 = sand.u32 %s52, 1
        %s188 = scalar_lea.sflag [#allocation5], %s187
        %s189 = sand.u32 %s52, 1
        %s190 = smul.addr %s189, 16
        %s191 = scalar_lea.vmem [#allocation4], %s190
        %p192 = pneg %p65
        %p193 = pneg %p62
        %p194 = scmp.lt.s32.totalorder %s24, 0
        %s195 = scalar_select %p194, %s24, 0
        %s196 = smul.addr %s195, 2
        %s197 = scalar_lea.vmem %s1, %s196
        %p198 = pneg %p91
        %p199 = pneg %p88
        %p200 = pneg %p121
        %p201 = pneg %p118
        %s202 = sand.u32 %s108, 1
        %s203 = scalar_lea.sflag [#allocation6], %s202
        %s204 = sand.u32 %s108, 1
        %s205 = smul.addr %s204, 16
        %s206 = scalar_lea.vmem [#allocation7], %s205
        %s207 = ssub.s32 1, %s25
        %s208 = smul.u32 %s207, %s26
        %s209 = smul.u32 2, %s208
        %p210 = scmp.lt.s32.totalorder %s24, 0
        %s211 = scalar_select %p210, %s24, 0
        %s212 = smul.addr %s211, 2
        %s213 = scalar_lea.vmem %s1, %s212
        %s214 = smul.u32 %s25, %s26
        %s215 = smul.u32 2, %s214
        %p216 = scmp.eq.s32.totalorder %s25, 0
        // Predicated region
        $region33: #{tpu_custom_call.1} parent=27 // pred_check
          %p217 = pneg %p216
        $region34: #{tpu_custom_call.1} parent=27 // pred_check_branch
          %219 = sbr.rel (%p217) target = $region36
        $region35: #{tpu_custom_call.1} parent=27 // pred_region
          %p220 = scmp.eq.s32.totalorder %s26, 0
          // Predicated region
          $region37: #{tpu_custom_call.1} parent=35 // pred_check
            %p221 = pneg %p220
          $region38: #{tpu_custom_call.1} parent=35 // pred_check_branch
            %223 = sbr.rel (%p221) target = $region40
          $region39: #{tpu_custom_call.1} parent=35 // pred_region
            %vm224 = vcmask 254976
            %225 = vst.msk [vmem:[#allocation3] sm:$0x3] %vm224, 0.0
          $region40: #{tpu_custom_call.1} parent=35 // pred_fallthru
            _
          %v226 = vld [vmem:[%s182] sm:$0xff]
          %v227 = vld [vmem:[%s182 + $0x8] sm:$0xff]
          %s228 = smul.u32 %s26, 16
          %s229 = scalar_lea.vmem [#allocation2], %s228
          %vm230 = vcmask 261120
          %231 = vst.msk [vmem:[%s229] sm:$0xff] %vm230, %v226
          %232 = vst.msk [vmem:[%s229 + $0x8] sm:$0xff] %vm230, %v227
          %v233 = vld [vmem:[#allocation3] sm:$0x1]
          %v234 = vsel %vm230, %v226, 0.0
          %v235 = vsel %vm230, %v227, 0.0
          %v236 = vadd.f32 %v234, %v235
          %v237 = vrot.slane %v236, 4
          %v238 = vadd.f32 %v236, %v237
          %v239 = vrot.slane %v238, 2
          %v240 = vadd.f32 %v238, %v239
          %v241 = vrot.slane %v240, 1
          %v242 = vadd.f32 %v240, %v241
          %v243 = vadd.f32 %v233, %v242
          %vm244 = vcmask 253952
          %245 = vst.msk [vmem:[#allocation3] sm:$0x1] %vm244, %v243
          %v246 = vld [vmem:[#allocation3 + $0x1] sm:$0x1]
          %v247 = vmul.f32 %v226, %v226
          %v248 = vmul.f32 %v227, %v227
          %v249 = vsel %vm230, %v247, 0.0
          %v250 = vsel %vm230, %v248, 0.0
          %v251 = vadd.f32 %v249, %v250
          %v252 = vrot.slane %v251, 4
          %v253 = vadd.f32 %v251, %v252
          %v254 = vrot.slane %v253, 2
          %v255 = vadd.f32 %v253, %v254
          %v256 = vrot.slane %v255, 1
          %v257 = vadd.f32 %v255, %v256
          %v258 = vadd.f32 %v246, %v257
          %259 = vst.msk [vmem:[#allocation3 + $0x1] sm:$0x1] %vm244, %v258
          // Predicated region
          $region41: #{tpu_custom_call.1} parent=35 // pred_check
            %p260 = pneg %p220
          $region42: #{tpu_custom_call.1} parent=35 // pred_check_branch
            %262 = sbr.rel (%p260) target = $region44
          $region43: #{tpu_custom_call.1} parent=35 // pred_region
            %v263 = vld [vmem:[#allocation3] sm:$0x1]
            %v264 = vld [vmem:[#allocation3 + $0x1] sm:$0x1]
            %v265 = vmul.f32 %v263, 0.0625
            %v266 = vmul.f32 %v263, %v265
            %v267 = vsub.f32 %v264, %v266
            %v268 = vmul.f32 %v267, 0.06666667
            %v269 = vmax.f32 %v268, 0.0
            %v270 = vrsqrt.pop %v269
            %v271 = vmul.f32 %v269, %v270
            %vm272 = vcmp.eq.f32.partialorder %v269, inf
            %v273 = vsel %vm272, %v269, %v271
            %vm274 = vcmp.eq.f32.partialorder %v269, 0.0
            %v275 = vand.u32 %v269, 2147483648
            %v276 = vsel %vm274, %v275, %v273
            %v277 = vld [vmem:[%s213] sm:$0x1]
            %v278 = vadd.f32 %v276, 1e-06
            %v279 = vrcp.pop %v278
            %v280 = vmul.f32 %v277, %v279
            %v281 = vld [vmem:[%s213 + $0x1] sm:$0x1]
            %v282 = vmul.f32 %v265, %v280
            %v283 = vsub.f32 %v281, %v282
            %284 = vst.msk [vmem:[#allocation3] sm:$0x1] %vm244, %v280
            %285 = vst.msk [vmem:[#allocation3 + $0x1] sm:$0x1] %vm244, %v283
          $region44: #{tpu_custom_call.1} parent=35 // pred_fallthru
            _
        $region36: #{tpu_custom_call.1} parent=27 // pred_fallthru
          _
        %p286 = scmp.eq.s32.totalorder %s25, 1
        // Predicated region
        $region45: #{tpu_custom_call.1} parent=27 // pred_check
          %p287 = pneg %p286
        $region46: #{tpu_custom_call.1} parent=27 // pred_check_branch
          %289 = sbr.rel (%p287) target = $region48
        $region47: #{tpu_custom_call.1} parent=27 // pred_region
          %s290 = smul.u32 %s26, 16
          %s291 = scalar_lea.vmem [#allocation2], %s290
          %v292 = vld [vmem:[%s291] sm:$0xff]
          %v293 = vld [vmem:[%s291 + $0x8] sm:$0xff]
          %v294 = vld [vmem:[#allocation3] sm:$0x1]
          %v295 = vlaneseq
          %v296 = vshrl.u32 %v295, 7
          %v297 = vsub.s32 0, %v296
          %v298 = vrot.slane %v294, %v297
          %v299 = vmul.f32 %v292, %v298
          %v300 = vmul.f32 %v293, %v298
          %v301 = vld [vmem:[#allocation3 + $0x1] sm:$0x1]
          %v302 = vlaneseq
          %v303 = vshrl.u32 %v302, 7
          %v304 = vsub.s32 0, %v303
          %v305 = vrot.slane %v301, %v304
          %v306 = vadd.f32 %v299, %v305
          %v307 = vadd.f32 %v300, %v305
          %vm308 = vcmask 261120
          %309 = vst.msk [vmem:[%s206] sm:$0xff] %vm308, %v306
          %310 = vst.msk [vmem:[%s206 + $0x8] sm:$0xff] %vm308, %v307
        $region48: #{tpu_custom_call.1} parent=27 // pred_fallthru
          _
        %s311 = sand.u32 %s108, 1
        %s312 = scalar_lea.sflag [#allocation6], %s311
        %s313 = sand.u32 %s108, 1
        %s314 = smul.addr %s313, 16
        %s315 = scalar_lea.vmem [#allocation7], %s314
        // Predicated region
        $region49: #{tpu_custom_call.1} parent=27 // pred_check
          %p316 = pneg %p118
        $region50: #{tpu_custom_call.1} parent=27 // pred_check_branch
          %318 = sbr.rel (%p316) target = $region52
        $region51: #{tpu_custom_call.1} parent=27 // pred_region
          %s319 = smul.u32 %s25, %s26
          %s320 = smul.u32 2, %s319
          %s322 = ssub.s32 256, 256
          %323 = vsyncadd %s312, %s322
          %s324 = sadd.s32 %s24, %s320
          %s325 = smul.addr %s324, 128
          %s326 = scalar_lea.hbm %s2, %s325
          %s327 = sshll.u32 %s315, 4
          %s328 = int_to_ptr.vmem [resolvable:$true] %s327
          %333 = dma.vmem_to_hbm [thread:$0]  %s328, 256, %s326, %s312, 128, 128, 8
        $region52: #{tpu_custom_call.1} parent=27 // pred_fallthru
          _
      $region28: #{tpu_custom_call.1} parent=5 // pred_fallthru
        _
      %p334 = scmp.le.s32.totalorder 2, %s14
      // Predicated region
      $region53: #{tpu_custom_call.1} parent=5 // pred_check
        %p335 = pneg %p334
      $region54: #{tpu_custom_call.1} parent=5 // pred_check_branch
        %337 = sbr.rel (%p335) target = $region56
      $region55: #{tpu_custom_call.1} parent=5 // pred_region
        %s338 = ssub.s32 %s14, 2
        // Predicated region
        $region57: #{tpu_custom_call.1} parent=55 // pred_check
          %p339 = pneg %p124
        $region58: #{tpu_custom_call.1} parent=55 // pred_check_branch
          %341 = sbr.rel (%p339) target = $region60
        $region59: #{tpu_custom_call.1} parent=55 // pred_region
          %s342 = sand.u32 %s109, 1
          %s343 = scalar_lea.sflag [#allocation6], %s342
          %s344 = sand.u32 %s109, 1
          %s345 = smul.addr %s344, 16
          %s346 = scalar_lea.vmem [#allocation7], %s345
          %347 = dma.done %s343, 256
        $region60: #{tpu_custom_call.1} parent=55 // pred_fallthru
          _
      $region56: #{tpu_custom_call.1} parent=5 // pred_fallthru
        _
    $region6: #{tpu_custom_call.1} parent=1 // loop_footer
      %s18 = sadd.s32 1, %s14
    $region7: #{tpu_custom_call.1} parent=1 // loop_footer_branch
      %13 = sbr.rel target = $region3
    $region8: #{tpu_custom_call.1} parent=1 // loop_exit
      _
    %348 = vsyncpa [#allocation5], 1
    %s349 = scalar_lea.sflag [#allocation5], 1
    %350 = vsyncpa %s349, 1
    %351 = vsyncpa [#allocation6], 1
    %s352 = scalar_lea.sflag [#allocation6], 1
    %353 = vsyncpa %s352, 1

</llo_original>
